<compile_context>
chip_gen: v7x
topology: tpu7x:2x2x1
jax: 0.10.0
libtpu: 0.0.40
codegen_flags: <defaults>
</compile_context>

<pallas_src>
import functools

import jax
import jax.numpy as jnp
from jax import lax
from jax.experimental import pallas as pl
from jax.experimental.pallas import tpu as pltpu


def _round_up(x: int, m: int) -> int:
    return (x + m - 1) // m * m


def _pick_tile(total: int, candidates) -> int:
    for c in candidates:
        if total % c == 0:
            return c
    return 8  # unreachable: total is always a multiple of 8


def _l2_normalize(x):
    # PyTorch CosineSimilarity clamps with eps=1e-8; we clamp each row norm
    # (only differs for near-zero rows).
    sq = jnp.sum(x * x, axis=-1, keepdims=True)
    return x * lax.rsqrt(jnp.maximum(sq, 1e-16))


def _ntxent_kernel(zq_ref, zp_ref, zk_ref, out_ref, ssum_ref, *,
                   batch, batch_pad, inv_temp, matmul_dtype, has_pad):
    ci = pl.program_id(1)
    n_cb = pl.num_programs(1)

    zq = _l2_normalize(zq_ref[...].astype(jnp.float32))      # (rt, d_pad)
    zk = _l2_normalize(zk_ref[...].astype(jnp.float32))      # (ct, d_pad)

    # sim tile: contract the feature (last) dim of both operands -> the MXU
    # consumes zk untransposed (no XLU transpose, no (D, N) copy).
    sim = lax.dot_general(
        zq.astype(matmul_dtype), zk.astype(matmul_dtype),
        dimension_numbers=(((1,), (1,)), ((), ())),
        preferred_element_type=jnp.float32,
    ) * inv_temp                                              # (rt, ct) f32

    # All entries <= 1/temperature and diag(sim) == 1/temperature, so use it as
    # the stabilizer; the diagonal contributes exp(0) == 1 and is removed in
    # the finalize step by subtracting 1 from the running sum.
    e = jnp.exp(sim - inv_temp)
    if has_pad:
        ct = e.shape[1]
        col_ids = ci * ct + lax.broadcasted_iota(jnp.int32, (1, ct), 1)
        e = jnp.where((col_ids % batch_pad) < batch, e, 0.0)  # drop padded cols

    @pl.when(ci == 0)
    def _():
        ssum_ref[...] = jnp.zeros_like(ssum_ref)

    ssum_ref[...] += jnp.sum(e, axis=-1, keepdims=True)       # (rt, 1)

    @pl.when(ci == n_cb - 1)
    def _():
        # Positive pair: row-wise dot with the partner block (rows shifted by
        # +/- batch_pad, delivered via the partner BlockSpec index map).
        zp = _l2_normalize(zp_ref[...].astype(jnp.float32))
        pos = jnp.sum(zq * zp, axis=-1, keepdims=True) * inv_temp
        # logsumexp over all q != p: subtract the diagonal's exp() == 1.
        lse = jnp.log(ssum_ref[...] - 1.0) + inv_temp
        per_row = lse - pos
        if has_pad:
            rt = per_row.shape[0]
            ri = pl.program_id(0)
            row_ids = ri * rt + lax.broadcasted_iota(jnp.int32, (rt, 1), 0)
            per_row = jnp.where((row_ids % batch_pad) < batch, per_row, 0.0)
        out_ref[...] = per_row


def ntxent_loss(z_i, z_j, temperature, *, matmul_dtype=jnp.bfloat16):
    """Pallas TPU NT-Xent loss. z_i, z_j: (B, D). Returns scalar f32 loss."""
    assert z_i.shape == z_j.shape and z_i.ndim == 2
    batch, dim = z_i.shape
    n = 2 * batch

    # ---- static padding / tile selection --------------------------------
    d_pad = _round_up(dim, 128)                        # full lanes for the MXU
    if batch >= 256:
        b_pad = _round_up(batch, 256)
    elif batch >= 64:
        b_pad = _round_up(batch, 64)
    else:
        b_pad = _round_up(batch, 8)
    n_pad = 2 * b_pad
    rt = _pick_tile(b_pad, (256, 128, 64, 32, 16, 8))        # divides b_pad
    ct = _pick_tile(n_pad, (512, 256, 128, 64, 32, 16, 8))   # divides n_pad
    n_rb, n_cb = n_pad // rt, n_pad // ct
    half_rb = b_pad // rt
    has_pad = b_pad != batch

    # ---- stack + zero-pad in the wrapper (layout plumbing only) ---------
    z = jnp.zeros((n_pad, d_pad), jnp.float32)
    z = z.at[:batch, :dim].set(z_i.astype(jnp.float32))
    z = z.at[b_pad:b_pad + batch, :dim].set(z_j.astype(jnp.float32))

    kernel = functools.partial(
        _ntxent_kernel,
        batch=batch, batch_pad=b_pad, inv_temp=float(1.0 / temperature),
        matmul_dtype=matmul_dtype, has_pad=has_pad)

    # Explicit VMEM budget: double-buffered input tiles + in-kernel temporaries,
    # with a 32 MiB floor (safe on v5e/v6e/v7x; actual tile usage is far below).
    est = 2 * (2 * rt + ct) * d_pad * 4          # pipelined input tiles (f32)
    est += (2 * rt + ct) * d_pad * (4 + 2)       # normalized f32 + bf16 copies
    est += 3 * rt * ct * 4                       # sim / exp tiles
    vmem_limit = int(max(32 * 1024 * 1024, est + 4 * 1024 * 1024))

    per_row = pl.pallas_call(
        kernel,
        out_shape=jax.ShapeDtypeStruct((n_pad, 1), jnp.float32),
        grid_spec=pltpu.PrefetchScalarGridSpec(
            num_scalar_prefetch=0,
            grid=(n_rb, n_cb),
            in_specs=[
                # query rows: constant across the column sweep (fetched once/ri)
                pl.BlockSpec((rt, d_pad), lambda ri, ci: (ri, 0)),
                # partner rows of the same block (+/- batch_pad)
                pl.BlockSpec((rt, d_pad),
                             lambda ri, ci: ((ri + half_rb) % n_rb, 0)),
                # key rows: streamed along the reduction axis
                pl.BlockSpec((ct, d_pad), lambda ri, ci: (ci, 0)),
            ],
            out_specs=pl.BlockSpec((rt, 1), lambda ri, ci: (ri, 0)),
            scratch_shapes=[pltpu.VMEM((rt, 1), jnp.float32)],
        ),
        compiler_params=pltpu.CompilerParams(
            dimension_semantics=("parallel", "arbitrary"),
            vmem_limit_bytes=vmem_limit,
        ),
    )(z, z, z)

    # Padded rows are written as 0 by the kernel; tiny wrapper-side reduce.
    return jnp.sum(per_row) / jnp.float32(n)


if __name__ == "__main__":
    key = jax.random.PRNGKey(0)
    k1, k2 = jax.random.split(key)
    batch_size, hidden = 8, 32
    temperature = 0.3

    z_i = jax.random.normal(k1, (batch_size, hidden), dtype=jnp.float32)
    z_j = jax.random.normal(k2, (batch_size, hidden), dtype=jnp.float32)

    loss = jax.jit(ntxent_loss, static_argnums=2)(z_i, z_j, temperature)
    jax.block_until_ready(loss)
    print("KERNEL_OK")
</pallas_src>

<mosaic_0001>
module attributes {stable_mosaic.version = 11 : i64} {
  func.func @_ntxent_kernel(%arg0: i32, %arg1: i32, %arg2: memref<8x128xf32, #tpu.memory_space<vmem>>, %arg3: memref<8x128xf32, #tpu.memory_space<vmem>>, %arg4: memref<16x128xf32, #tpu.memory_space<vmem>>, %arg5: memref<8x1xf32, #tpu.memory_space<vmem>>, %arg6: memref<8x1xf32, #tpu.memory_space<vmem>>) attributes {dimension_semantics = [#tpu.dimension_semantics<parallel>, #tpu.dimension_semantics<arbitrary>], iteration_bounds = array<i64: 2, 1>, scalar_prefetch = 0 : i64, scratch_operands = 1 : i64, tpu.core_type = #tpu.core_type<tc>, window_params = [{transform_indices = @transform_0, window_bounds = array<i64: 8, 128>}, {transform_indices = @transform_1, window_bounds = array<i64: 8, 128>}, {transform_indices = @transform_2, window_bounds = array<i64: 16, 128>}, {transform_indices = @transform_3, window_bounds = array<i64: 8, 1>}]} {
    %c0 = arith.constant 0 : index
    %c0_0 = arith.constant 0 : index
    %0 = vector.load %arg2[%c0, %c0_0] : memref<8x128xf32, #tpu.memory_space<vmem>>, vector<8x128xf32>
    %1 = arith.mulf %0, %0 : vector<8x128xf32>
    %cst = arith.constant dense<0.000000e+00> : vector<8xf32>
    %2 = vector.multi_reduction <add>, %1, %cst [1] : vector<8x128xf32> to vector<8xf32>
    %3 = vector.shape_cast %2 : vector<8xf32> to vector<8x1xf32>
    %cst_1 = arith.constant 1.000000e-16 : f32
    %4 = vector.broadcast %cst_1 : f32 to vector<8x1xf32>
    %5 = arith.maximumf %3, %4 : vector<8x1xf32>
    %6 = math.rsqrt %5 : vector<8x1xf32>
    %7 = vector.broadcast %6 : vector<8x1xf32> to vector<8x128xf32>
    %8 = arith.mulf %0, %7 : vector<8x128xf32>
    %c0_2 = arith.constant 0 : index
    %c0_3 = arith.constant 0 : index
    %9 = vector.load %arg4[%c0_2, %c0_3] : memref<16x128xf32, #tpu.memory_space<vmem>>, vector<16x128xf32>
    %10 = arith.mulf %9, %9 : vector<16x128xf32>
    %cst_4 = arith.constant dense<0.000000e+00> : vector<16xf32>
    %11 = vector.multi_reduction <add>, %10, %cst_4 [1] : vector<16x128xf32> to vector<16xf32>
    %12 = vector.shape_cast %11 : vector<16xf32> to vector<16x1xf32>
    %cst_5 = arith.constant 1.000000e-16 : f32
    %13 = vector.broadcast %cst_5 : f32 to vector<16x1xf32>
    %14 = arith.maximumf %12, %13 : vector<16x1xf32>
    %15 = math.rsqrt %14 : vector<16x1xf32>
    %16 = vector.broadcast %15 : vector<16x1xf32> to vector<16x128xf32>
    %17 = arith.mulf %9, %16 : vector<16x128xf32>
    %18 = arith.truncf %8 : vector<8x128xf32> to vector<8x128xbf16>
    %19 = arith.truncf %17 : vector<16x128xf32> to vector<16x128xbf16>
    %cst_6 = arith.constant dense<0.000000e+00> : vector<8x16xf32>
    %20 = tpu.matmul %18, %19, %cst_6 {dimension_numbers = #tpu.dot_dimension_numbers<[1], [1], [0], [0], [0, 0, 1, 0], [], []>} : vector<8x128xbf16>, vector<16x128xbf16>, vector<8x16xf32> -> vector<8x16xf32>
    %cst_7 = arith.constant 3.33333325 : f32
    %21 = vector.broadcast %cst_7 : f32 to vector<8x16xf32>
    %22 = arith.mulf %20, %21 : vector<8x16xf32>
    %cst_8 = arith.constant 3.33333325 : f32
    %23 = vector.broadcast %cst_8 : f32 to vector<8x16xf32>
    %24 = arith.subf %22, %23 : vector<8x16xf32>
    %25 = math.exp %24 : vector<8x16xf32>
    %c0_i32 = arith.constant 0 : i32
    %26 = arith.cmpi eq, %arg1, %c0_i32 : i32
    %27 = arith.extui %26 : i1 to i32
    %c0_i32_9 = arith.constant 0 : i32
    %28 = arith.cmpi ne, %27, %c0_i32_9 : i32
    scf.if %28 {
      %cst_17 = arith.constant 0.000000e+00 : f32
      %37 = vector.broadcast %cst_17 : f32 to vector<8x1xf32>
      %c0_18 = arith.constant 0 : index
      %c0_19 = arith.constant 0 : index
      %38 = vector.load %arg6[%c0_18, %c0_19] : memref<8x1xf32, #tpu.memory_space<vmem>>, vector<8x1xf32>
      tpu.vector_store %arg6[%c0_18, %c0_19], %37 {strides = array<i32>} : memref<8x1xf32, #tpu.memory_space<vmem>>, vector<8x1xf32>,
    } else {
    }
    %c0_10 = arith.constant 0 : index
    %c0_11 = arith.constant 0 : index
    %29 = vector.load %arg6[%c0_10, %c0_11] : memref<8x1xf32, #tpu.memory_space<vmem>>, vector<8x1xf32>
    %cst_12 = arith.constant dense<0.000000e+00> : vector<8xf32>
    %30 = vector.multi_reduction <add>, %25, %cst_12 [1] : vector<8x16xf32> to vector<8xf32>
    %31 = vector.shape_cast %30 : vector<8xf32> to vector<8x1xf32>
    %32 = arith.addf %29, %31 : vector<8x1xf32>
    %c0_13 = arith.constant 0 : index
    %c0_14 = arith.constant 0 : index
    %33 = vector.load %arg6[%c0_13, %c0_14] : memref<8x1xf32, #tpu.memory_space<vmem>>, vector<8x1xf32>
    tpu.vector_store %arg6[%c0_13, %c0_14], %32 {strides = array<i32>} : memref<8x1xf32, #tpu.memory_space<vmem>>, vector<8x1xf32>,
    %c0_i32_15 = arith.constant 0 : i32
    %34 = arith.cmpi eq, %arg1, %c0_i32_15 : i32
    %35 = arith.extui %34 : i1 to i32
    %c0_i32_16 = arith.constant 0 : i32
    %36 = arith.cmpi ne, %35, %c0_i32_16 : i32
    scf.if %36 {
      %c0_17 = arith.constant 0 : index
      %c0_18 = arith.constant 0 : index
      %37 = vector.load %arg3[%c0_17, %c0_18] : memref<8x128xf32, #tpu.memory_space<vmem>>, vector<8x128xf32>
      %38 = arith.mulf %37, %37 : vector<8x128xf32>
      %cst_19 = arith.constant dense<0.000000e+00> : vector<8xf32>
      %39 = vector.multi_reduction <add>, %38, %cst_19 [1] : vector<8x128xf32> to vector<8xf32>
      %40 = vector.shape_cast %39 : vector<8xf32> to vector<8x1xf32>
      %cst_20 = arith.constant 1.000000e-16 : f32
      %41 = vector.broadcast %cst_20 : f32 to vector<8x1xf32>
      %42 = arith.maximumf %40, %41 : vector<8x1xf32>
      %43 = math.rsqrt %42 : vector<8x1xf32>
      %44 = vector.broadcast %43 : vector<8x1xf32> to vector<8x128xf32>
      %45 = arith.mulf %37, %44 : vector<8x128xf32>
      %46 = arith.mulf %8, %45 : vector<8x128xf32>
      %cst_21 = arith.constant dense<0.000000e+00> : vector<8xf32>
      %47 = vector.multi_reduction <add>, %46, %cst_21 [1] : vector<8x128xf32> to vector<8xf32>
      %48 = vector.shape_cast %47 : vector<8xf32> to vector<8x1xf32>
      %cst_22 = arith.constant 3.33333325 : f32
      %49 = vector.broadcast %cst_22 : f32 to vector<8x1xf32>
      %50 = arith.mulf %48, %49 : vector<8x1xf32>
      %c0_23 = arith.constant 0 : index
      %c0_24 = arith.constant 0 : index
      %51 = vector.load %arg6[%c0_23, %c0_24] : memref<8x1xf32, #tpu.memory_space<vmem>>, vector<8x1xf32>
      %cst_25 = arith.constant 1.000000e+00 : f32
      %52 = vector.broadcast %cst_25 : f32 to vector<8x1xf32>
      %53 = arith.subf %51, %52 : vector<8x1xf32>
      %54 = math.log %53 : vector<8x1xf32>
      %cst_26 = arith.constant 3.33333325 : f32
      %55 = vector.broadcast %cst_26 : f32 to vector<8x1xf32>
      %56 = arith.addf %54, %55 : vector<8x1xf32>
      %57 = arith.subf %56, %50 : vector<8x1xf32>
      %c0_27 = arith.constant 0 : index
      %c0_28 = arith.constant 0 : index
      %58 = vector.load %arg5[%c0_27, %c0_28] : memref<8x1xf32, #tpu.memory_space<vmem>>, vector<8x1xf32>
      tpu.vector_store %arg5[%c0_27, %c0_28], %57 {strides = array<i32>} : memref<8x1xf32, #tpu.memory_space<vmem>>, vector<8x1xf32>,
    } else {
    }
    return
  }
  func.func @transform_0(%arg0: i32, %arg1: i32) -> (i32, i32) {
    %c0_i32 = arith.constant 0 : i32
    %c0_i32_0 = arith.constant 0 : i32
    return %arg0, %c0_i32 : i32, i32
  }
  func.func @transform_1(%arg0: i32, %arg1: i32) -> (i32, i32) {
    %c1_i32 = arith.constant 1 : i32
    %0 = arith.addi %arg0, %c1_i32 : i32
    %c2_i32 = arith.constant 2 : i32
    %c0_i32 = arith.constant 0 : i32
    %1 = arith.cmpi eq, %c2_i32, %c0_i32 : i32
    %c1_i32_0 = arith.constant 1 : i32
    %2 = arith.select %1, %c1_i32_0, %c2_i32 : i32
    %3 = arith.remsi %0, %2 : i32
    %c0_i32_1 = arith.constant 0 : i32
    %4 = arith.cmpi ne, %3, %c0_i32_1 : i32
    %c0_i32_2 = arith.constant 0 : i32
    %5 = arith.cmpi slt, %3, %c0_i32_2 : i32
    %c0_i32_3 = arith.constant 0 : i32
    %6 = arith.cmpi slt, %2, %c0_i32_3 : i32
    %7 = arith.xori %5, %6 : i1
    %8 = arith.andi %7, %4 : i1
    %9 = arith.addi %3, %2 : i32
    %10 = arith.select %8, %9, %3 : i32
    %c0_i32_4 = arith.constant 0 : i32
    %c0_i32_5 = arith.constant 0 : i32
    return %10, %c0_i32_4 : i32, i32
  }
  func.func @transform_2(%arg0: i32, %arg1: i32) -> (i32, i32) {
    %c0_i32 = arith.constant 0 : i32
    %c0_i32_0 = arith.constant 0 : i32
    return %arg1, %c0_i32 : i32, i32
  }
  func.func @transform_3(%arg0: i32, %arg1: i32) -> (i32, i32) {
    %c0_i32 = arith.constant 0 : i32
    %c0_i32_0 = arith.constant 0 : i32
    return %arg0, %c0_i32 : i32, i32
  }
}

</mosaic_0001>

<llo_original>
// kernel: ntxent_loss.1
$region0: #{ntxent_loss.1}
  #allocation0 [shape = 'u32[]', space=smem, size = 0x4, offset = 0x4, fixed_abs, tag = 'smem constant byte address 0x4 - core index']
  #allocation1 [shape = 'u32[144,128]{1,0:T(1,128)}', space=vmem, size = 0x12000, scoped, tag = 'internal scratch']
  #allocation2 [shape = 'f32[8,1]{1,0:T(8,128)}', space=vmem, size = 0x1000, scoped, tag = 'scratch operand']
  %s0 = inlined_call_operand.vmem [shape: f32[16,128], index: 0, kind: input, shape index: {}, may-alias: {0,1,2}]
  %s1 = inlined_call_operand.vmem [shape: f32[16,128], index: 1, kind: input, shape index: {}, may-alias: {0,1,2}]
  %s2 = inlined_call_operand.vmem [shape: f32[16,128], index: 2, kind: input, shape index: {}, may-alias: {0,1,2}]
  %s3 = inlined_call_operand.vmem [shape: f32[16,1], index: 3, kind: output, shape index: {}]
  %s4 = sld [smem:[#allocation0]]
  $region53: #{ntxent_loss.1} parent=0
    _
  %s6 = ssub.s32 1, %s4
  %s7 = scalar_select 0, %s6, %s4
  loop: start=0, step=1, limit=4
  $region2: #{ntxent_loss.1} parent=0 // loop_pre_header
    _
  $region3: #{ntxent_loss.1} parent=0 // loop_header
    %s9 = sphi 0, %s13
    %p10 = scmp.ge.s32.totalorder %s9, 4
    %s16 = sphi 0, %s28
    %s17 = sphi 0, %s24
    %s18 = sphi 0, %s16
    %s19 = sphi 0, %s17
    %s20 = sphi 0, %s18
    %s21 = sphi 0, %s19
    %s31 = sphi 0, %s33
    %s34 = sphi 0, %s31
    %s35 = sphi 0, %s34
    %s51 = sphi 0, %s35
    %s83 = sphi 0, %s85
    %s86 = sphi 0, %s83
    %s87 = sphi 0, %s86
    %s103 = sphi 0, %s87
    %s109 = sphi 0, %s111
    %s112 = sphi 0, %s109
    %s113 = sphi 0, %s112
    %s129 = sphi 0, %s113
    %s135 = sphi 0, %s137
    %s138 = sphi 0, %s135
    %s139 = sphi 0, %s138
    %s155 = sphi 0, %s139
  $region4: #{ntxent_loss.1} parent=0 // loop_header_branch
    %12 = sbr.rel (%p10) target = $region8
  $region5: #{ntxent_loss.1} parent=0 // loop_body
    %s14 = ssub.s32 %s9, 1
    %s15 = ssub.s32 %s9, 2
    %s22 = sadd.s32 1, %s17
    %p23 = scmp.ge.s32.totalorder %s22, 1
    %s24 = scalar_select %p23, 0, %s22
    %s25 = sadd.s32 1, %s16
    %s26 = scalar_select %p23, %s25, %s16
    %p27 = scmp.ge.s32.totalorder %s26, 2
    %s28 = scalar_select %p27, 0, %s26
    %s29 = ssub.s32 %s16, %s28
    %p30 = scmp.eq.s32.totalorder %s29, 0
    %s32 = sadd.s32 %s31, 1
    %s33 = scalar_select %p30, %s31, %s32
    %p36 = pneg %p30
    %p37 = scmp.eq.s32.totalorder %s9, 1
    %p38 = por %p36, %p37
    %p39 = scmp.ne.s32.totalorder %s31, %s34
    %p40 = scmp.eq.s32.totalorder %s9, 0
    %p41 = por %p39, %p40
    %p42 = scmp.ne.s32.totalorder %s31, %s34
    %p43 = scmp.eq.s32.totalorder %s14, 1
    %p44 = por %p42, %p43
    %p45 = scmp.ne.s32.totalorder %s34, %s35
    %p46 = scmp.eq.s32.totalorder %s14, 0
    %p47 = por %p45, %p46
    %p48 = scmp.ne.s32.totalorder %s34, %s35
    %p49 = scmp.eq.s32.totalorder %s15, 1
    %p50 = por %p48, %p49
    %p52 = scmp.ne.s32.totalorder %s35, %s51
    %p53 = scmp.eq.s32.totalorder %s15, 0
    %p54 = por %p52, %p53
    %s55 = sadd.s32 %s16, 1
    %p56 = scmp.lt.s32.totalorder %s55, 0
    %s57 = ssub.s32 0, %s55
    %s58 = scalar_select %p56, %s57, %s55
    %s59 = sand.u32 %s58, 1
    %s60 = ssub.s32 0, %s59
    %s61 = scalar_select %p56, %s60, %s59
    %p62 = scmp.ne.s32.totalorder %s61, 0
    %p63 = scmp.lt.s32.totalorder %s61, 0
    %p64 = pnand %p63, %p62
    %p65 = pneg %p64
    %s66 = sadd.s32 %s61, 2
    %s67 = scalar_select %p65, %s66, %s61
    %s68 = sadd.s32 %s28, 1
    %p69 = scmp.lt.s32.totalorder %s68, 0
    %s70 = ssub.s32 0, %s68
    %s71 = scalar_select %p69, %s70, %s68
    %s72 = sand.u32 %s71, 1
    %s73 = ssub.s32 0, %s72
    %s74 = scalar_select %p69, %s73, %s72
    %p75 = scmp.ne.s32.totalorder %s74, 0
    %p76 = scmp.lt.s32.totalorder %s74, 0
    %p77 = pnand %p76, %p75
    %p78 = pneg %p77
    %s79 = sadd.s32 %s74, 2
    %s80 = scalar_select %p78, %s79, %s74
    %s81 = ssub.s32 %s67, %s80
    %p82 = scmp.eq.s32.totalorder %s81, 0
    %s84 = sadd.s32 %s83, 1
    %s85 = scalar_select %p82, %s83, %s84
    %p88 = pneg %p82
    %p89 = scmp.eq.s32.totalorder %s9, 1
    %p90 = por %p88, %p89
    %p91 = scmp.ne.s32.totalorder %s83, %s86
    %p92 = scmp.eq.s32.totalorder %s9, 0
    %p93 = por %p91, %p92
    %p94 = scmp.ne.s32.totalorder %s83, %s86
    %p95 = scmp.eq.s32.totalorder %s14, 1
    %p96 = por %p94, %p95
    %p97 = scmp.ne.s32.totalorder %s86, %s87
    %p98 = scmp.eq.s32.totalorder %s14, 0
    %p99 = por %p97, %p98
    %p100 = scmp.ne.s32.totalorder %s86, %s87
    %p101 = scmp.eq.s32.totalorder %s15, 1
    %p102 = por %p100, %p101
    %p104 = scmp.ne.s32.totalorder %s87, %s103
    %p105 = scmp.eq.s32.totalorder %s15, 0
    %p106 = por %p104, %p105
    %s107 = ssub.s32 %s17, %s24
    %p108 = scmp.eq.s32.totalorder %s107, 0
    %s110 = sadd.s32 %s109, 1
    %s111 = scalar_select %p108, %s109, %s110
    %p114 = pneg %p108
    %p115 = scmp.eq.s32.totalorder %s9, 1
    %p116 = por %p114, %p115
    %p117 = scmp.ne.s32.totalorder %s109, %s112
    %p118 = scmp.eq.s32.totalorder %s9, 0
    %p119 = por %p117, %p118
    %p120 = scmp.ne.s32.totalorder %s109, %s112
    %p121 = scmp.eq.s32.totalorder %s14, 1
    %p122 = por %p120, %p121
    %p123 = scmp.ne.s32.totalorder %s112, %s113
    %p124 = scmp.eq.s32.totalorder %s14, 0
    %p125 = por %p123, %p124
    %p126 = scmp.ne.s32.totalorder %s112, %s113
    %p127 = scmp.eq.s32.totalorder %s15, 1
    %p128 = por %p126, %p127
    %p130 = scmp.ne.s32.totalorder %s113, %s129
    %p131 = scmp.eq.s32.totalorder %s15, 0
    %p132 = por %p130, %p131
    %s133 = ssub.s32 %s16, %s28
    %p134 = scmp.eq.s32.totalorder %s133, 0
    %s136 = sadd.s32 %s135, 1
    %s137 = scalar_select %p134, %s135, %s136
    %p140 = pneg %p134
    %p141 = scmp.eq.s32.totalorder %s9, 1
    %p142 = por %p140, %p141
    %p143 = scmp.ne.s32.totalorder %s135, %s138
    %p144 = scmp.eq.s32.totalorder %s9, 0
    %p145 = por %p143, %p144
    %p146 = scmp.ne.s32.totalorder %s135, %s138
    %p147 = scmp.eq.s32.totalorder %s14, 1
    %p148 = por %p146, %p147
    %p149 = scmp.ne.s32.totalorder %s138, %s139
    %p150 = scmp.eq.s32.totalorder %s14, 0
    %p151 = por %p149, %p150
    %p152 = scmp.ne.s32.totalorder %s138, %s139
    %p153 = scmp.eq.s32.totalorder %s15, 1
    %p154 = por %p152, %p153
    %p156 = scmp.ne.s32.totalorder %s139, %s155
    %p157 = scmp.eq.s32.totalorder %s15, 0
    %p158 = por %p156, %p157
    %p159 = scmp.le.s32.totalorder 1, %s9
    %p160 = scmp.lt.s32.totalorder %s9, 3
    %p161 = pnand %p159, %p160
    %p162 = pneg %p161
    // Predicated region
    $region9: #{ntxent_loss.1} parent=5 // pred_check
      _
    $region10: #{ntxent_loss.1} parent=5 // pred_check_branch
      %164 = sbr.rel (%p161) target = $region12
    $region11: #{ntxent_loss.1} parent=5 // pred_region
      %s165 = ssub.s32 %s9, 1
      // Predicated region
      $region13: #{ntxent_loss.1} parent=11 // pred_check
        %p166 = pneg %p125
      $region14: #{ntxent_loss.1} parent=11 // pred_check_branch
        %168 = sbr.rel (%p166) target = $region16
      $region15: #{ntxent_loss.1} parent=11 // pred_region
        %s169 = smul.u32 2, %s19
        %p170 = scmp.lt.s32.totalorder %s169, 1
        %s171 = scalar_select %p170, %s169, 1
        %s172 = smul.addr %s171, 8
        %s173 = scalar_lea.vmem %s2, %s172
        %s174 = smul.u32 2, %s19
      $region16: #{ntxent_loss.1} parent=11 // pred_fallthru
        _
    $region12: #{ntxent_loss.1} parent=5 // pred_fallthru
      _
    %p175 = scmp.lt.s32.totalorder %s9, 2
    // Predicated region
    $region17: #{ntxent_loss.1} parent=5 // pred_check
      %p176 = pneg %p175
    $region18: #{ntxent_loss.1} parent=5 // pred_check_branch
      %178 = sbr.rel (%p176) target = $region20
    $region19: #{ntxent_loss.1} parent=5 // pred_region
      // Predicated region
      $region21: #{ntxent_loss.1} parent=19 // pred_check
        %p179 = pneg %p41
      $region22: #{ntxent_loss.1} parent=19 // pred_check_branch
        %181 = sbr.rel (%p179) target = $region24
      $region23: #{ntxent_loss.1} parent=19 // pred_region
        %p182 = scmp.lt.s32.totalorder %s16, 1
        %s183 = scalar_select %p182, %s16, 1
        %s184 = smul.addr %s183, 8
        %s185 = scalar_lea.vmem %s0, %s184
      $region24: #{ntxent_loss.1} parent=19 // pred_fallthru
        _
      // Predicated region
      $region25: #{ntxent_loss.1} parent=19 // pred_check
        %p186 = pneg %p93
      $region26: #{ntxent_loss.1} parent=19 // pred_check_branch
        %188 = sbr.rel (%p186) target = $region28
      $region27: #{ntxent_loss.1} parent=19 // pred_region
        %s189 = sadd.s32 %s16, 1
        %p190 = scmp.lt.s32.totalorder %s189, 0
        %s191 = ssub.s32 0, %s189
        %s192 = scalar_select %p190, %s191, %s189
        %s193 = sand.u32 %s192, 1
        %s194 = ssub.s32 0, %s193
        %s195 = scalar_select %p190, %s194, %s193
        %p196 = scmp.ne.s32.totalorder %s195, 0
        %p197 = scmp.lt.s32.totalorder %s195, 0
        %p198 = pnand %p197, %p196
        %p199 = pneg %p198
        %s200 = sadd.s32 %s195, 2
        %s201 = scalar_select %p199, %s200, %s195
        %p202 = scmp.lt.s32.totalorder %s201, 1
        %s203 = scalar_select %p202, %s201, 1
        %s204 = smul.addr %s203, 8
        %s205 = scalar_lea.vmem %s1, %s204
        %s206 = sadd.s32 %s16, 1
        %p207 = scmp.lt.s32.totalorder %s206, 0
        %s208 = ssub.s32 0, %s206
        %s209 = scalar_select %p207, %s208, %s206
        %s210 = sand.u32 %s209, 1
        %s211 = ssub.s32 0, %s210
        %s212 = scalar_select %p207, %s211, %s210
        %p213 = scmp.ne.s32.totalorder %s212, 0
        %p214 = scmp.lt.s32.totalorder %s212, 0
        %p215 = pnand %p214, %p213
        %p216 = pneg %p215
        %s217 = sadd.s32 %s212, 2
        %s218 = scalar_select %p216, %s217, %s212
      $region28: #{ntxent_loss.1} parent=19 // pred_fallthru
        _
    $region20: #{ntxent_loss.1} parent=5 // pred_fallthru
      _
    %p219 = scmp.le.s32.totalorder 1, %s9
    %p220 = scmp.lt.s32.totalorder %s9, 3
    %p221 = pnand %p219, %p220
    %p222 = pneg %p221
    // Predicated region
    $region29: #{ntxent_loss.1} parent=5 // pred_check
      _
    $region30: #{ntxent_loss.1} parent=5 // pred_check_branch
      %224 = sbr.rel (%p221) target = $region32
    $region31: #{ntxent_loss.1} parent=5 // pred_region
      %s225 = ssub.s32 %s9, 1
      %p226 = scmp.lt.s32.totalorder %s18, 1
      %s227 = scalar_select %p226, %s18, 1
      %s228 = smul.addr %s227, 8
      %s229 = scalar_lea.vmem %s0, %s228
      %p230 = pneg %p47
      %p231 = pneg %p44
      %s232 = sadd.s32 %s18, 1
      %p233 = scmp.lt.s32.totalorder %s232, 0
      %s234 = ssub.s32 0, %s232
      %s235 = scalar_select %p233, %s234, %s232
      %s236 = sand.u32 %s235, 1
      %s237 = ssub.s32 0, %s236
      %s238 = scalar_select %p233, %s237, %s236
      %p239 = scmp.ne.s32.totalorder %s238, 0
      %p240 = scmp.lt.s32.totalorder %s238, 0
      %p241 = pnand %p240, %p239
      %p242 = pneg %p241
      %s243 = sadd.s32 %s238, 2
      %s244 = scalar_select %p242, %s243, %s238
      %p245 = scmp.lt.s32.totalorder %s244, 1
      %s246 = scalar_select %p245, %s244, 1
      %s247 = smul.addr %s246, 8
      %s248 = scalar_lea.vmem %s1, %s247
      %p249 = pneg %p99
      %p250 = pneg %p96
      %s251 = smul.u32 2, %s19
      %p252 = scmp.lt.s32.totalorder %s251, 1
      %s253 = scalar_select %p252, %s251, 1
      %s254 = smul.addr %s253, 8
      %s255 = scalar_lea.vmem %s2, %s254
      %p256 = pneg %p125
      %p257 = pneg %p122
      %p258 = pneg %p151
      %p259 = pneg %p148
      %p260 = scmp.lt.s32.totalorder %s18, 1
      %s261 = scalar_select %p260, %s18, 1
      %s262 = smul.addr %s261, 8
      %s263 = scalar_lea.vmem %s3, %s262
      %p264 = scmp.lt.s32.totalorder %s18, 1
      %s265 = scalar_select %p264, %s18, 1
      %s266 = smul.addr %s265, 8
      %s267 = scalar_lea.vmem %s0, %s266
      %s268 = sadd.s32 %s18, 1
      %p269 = scmp.lt.s32.totalorder %s268, 0
      %s270 = ssub.s32 0, %s268
      %s271 = scalar_select %p269, %s270, %s268
      %s272 = sand.u32 %s271, 1
      %s273 = ssub.s32 0, %s272
      %s274 = scalar_select %p269, %s273, %s272
      %p275 = scmp.ne.s32.totalorder %s274, 0
      %p276 = scmp.lt.s32.totalorder %s274, 0
      %p277 = pnand %p276, %p275
      %p278 = pneg %p277
      %s279 = sadd.s32 %s274, 2
      %s280 = scalar_select %p278, %s279, %s274
      %p281 = scmp.lt.s32.totalorder %s280, 1
      %s282 = scalar_select %p281, %s280, 1
      %s283 = smul.addr %s282, 8
      %s284 = scalar_lea.vmem %s1, %s283
      %s285 = sadd.s32 %s18, 1
      %p286 = scmp.lt.s32.totalorder %s285, 0
      %s287 = ssub.s32 0, %s285
      %s288 = scalar_select %p286, %s287, %s285
      %s289 = sand.u32 %s288, 1
      %s290 = ssub.s32 0, %s289
      %s291 = scalar_select %p286, %s290, %s289
      %p292 = scmp.ne.s32.totalorder %s291, 0
      %p293 = scmp.lt.s32.totalorder %s291, 0
      %p294 = pnand %p293, %p292
      %p295 = pneg %p294
      %s296 = sadd.s32 %s291, 2
      %s297 = scalar_select %p295, %s296, %s291
      %s298 = smul.u32 2, %s19
      %p299 = scmp.lt.s32.totalorder %s298, 1
      %s300 = scalar_select %p299, %s298, 1
      %s301 = smul.addr %s300, 8
      %s302 = scalar_lea.vmem %s2, %s301
      %s303 = smul.u32 2, %s19
      %p304 = scmp.lt.s32.totalorder %s18, 1
      %s305 = scalar_select %p304, %s18, 1
      %s306 = smul.addr %s305, 8
      %s307 = scalar_lea.vmem %s3, %s306
      %v309 = vld [vmem:[%s267] sm:$0xff]
      %v310 = vmul.f32 %v309, %v309
      %311 = vadd.xlane.f32.xlu0 %v310
      %v312 = vpop.xlane.xlu0 %311
      %v313 = vmax.f32 %v312, 1e-16
      %v314 = vrsqrt.pop %v313
      %v315 = vmul.f32 %v309, %v314
      %v316 = vld [vmem:[%s302] sm:$0xff]
      %v317 = vld [vmem:[%s302 + $0x8] sm:$0xff]
      %v318 = vmul.f32 %v316, %v316
      %v319 = vmul.f32 %v317, %v317
      %320 = vadd.xlane.f32.xlu0 %v318
      %v321 = vpop.xlane.xlu0 %320
      %322 = vadd.xlane.f32.xlu0 %v319
      %v323 = vpop.xlane.xlu0 %322
      %v324 = vmax.f32 %v321, 1e-16
      %v325 = vmax.f32 %v323, 1e-16
      %v326 = vrsqrt.pop %v324
      %v327 = vrsqrt.pop %v325
      %v328 = vmul.f32 %v316, %v326
      %v329 = vmul.f32 %v317, %v327
      %v330 = vpack.c.bf16 %v315, %v315
      %v331 = vpack.c.bf16 %v329, %v328
      %332 = vmatprep.subr.bf16.mxu0 0
      %333 = vmatpush1.bf16.xpose.msra.mxu0 %v331
      %334 = vmatprep.subr.bf16.mxu0 0
      %335 = vmatpush1.bf16.xpose.msra.mxu0 0
      %336 = vmatprep.subr.bf16.mxu0 0
      %337 = vmatpush1.bf16.xpose.msra.mxu0 0
      %338 = vmatprep.subr.bf16.mxu0 0
      %339 = vmatpush1.bf16.xpose.msra.mxu0 0
      %340 = vmatprep.subr.bf16.mxu0 0
      %341 = vmatpush1.bf16.xpose.msra.mxu0 0
      %342 = vmatprep.subr.bf16.mxu0 0
      %343 = vmatpush1.bf16.xpose.msra.mxu0 0
      %344 = vmatprep.subr.bf16.mxu0 0
      %345 = vmatpush1.bf16.xpose.msra.mxu0 0
      %346 = vmatprep.subr.bf16.mxu0 0
      %347 = vmatpush1.bf16.xpose.msra.mxu0 0
      %348 = vmatprep.subr.bf16.mxu0 0
      %349 = vmatpush1.bf16.xpose.msra.mxu0 0
      %350 = vmatprep.subr.bf16.mxu0 0
      %351 = vmatpush1.bf16.xpose.msra.mxu0 0
      %352 = vmatprep.subr.bf16.mxu0 0
      %353 = vmatpush1.bf16.xpose.msra.mxu0 0
      %354 = vmatprep.subr.bf16.mxu0 0
      %355 = vmatpush1.bf16.xpose.msra.mxu0 0
      %356 = vmatprep.subr.bf16.mxu0 0
      %357 = vmatpush1.bf16.xpose.msra.mxu0 0
      %358 = vmatprep.subr.bf16.mxu0 0
      %359 = vmatpush1.bf16.xpose.msra.mxu0 0
      %360 = vmatprep.subr.bf16.mxu0 0
      %361 = vmatpush1.bf16.xpose.msra.mxu0 0
      %362 = vmatprep.subr.bf16.mxu0 0
      %363 = vmatpush1.bf16.xpose.msra.mxu0 0
      %364 = vmatprep.mubr.bf16.mxu0 0
      %365 = vmatmul.mubr.bf16.gmra.mrb[0].mxu0 %v330
      %v366 = vpop.f32.mrb[0].mxu0
      %v367 = vadd.f32 0.0, %v366
      %v368 = vpop.f32.mrb[0].mxu0
      %v369 = vpop.f32.mrb[0].mxu0
      %v370 = vpop.f32.mrb[0].mxu0
      %371 = vdwg.mxu0
      %v372 = vmul.f32 %v367, 3.3333333
      %v373 = vsub.f32 %v372, 3.3333333
      %v374 = vmul.f32 %v373, 1.442695
      %v375 = vpow.pop %v374
      %p376 = scmp.eq.s32.totalorder %s19, 0
      // Predicated region
      $region33: #{ntxent_loss.1} parent=31 // pred_check
        %p377 = pneg %p376
      $region34: #{ntxent_loss.1} parent=31 // pred_check_branch
        %379 = sbr.rel (%p377) target = $region36
      $region35: #{ntxent_loss.1} parent=31 // pred_region
        %vm380 = vcmask 7168
        %381 = vst.msk [vmem:[#allocation2] sm:$0xff] %vm380, 0.0
      $region36: #{ntxent_loss.1} parent=31 // pred_fallthru
        _
      %v382 = vld [vmem:[#allocation2] sm:$0xff]
      %vm383 = vcmask 130048
      %v384 = vsel %vm383, %v375, 0.0
      %385 = vadd.xlane.f32.xlu0 %v384
      %v386 = vpop.xlane.xlu0 %385
      %v387 = vadd.f32 %v382, %v386
      %vm388 = vcmask 7168
      %389 = vst.msk [vmem:[#allocation2] sm:$0xff] %vm388, %v387
      // Predicated region
      $region37: #{ntxent_loss.1} parent=31 // pred_check
        %p390 = pneg %p376
      $region38: #{ntxent_loss.1} parent=31 // pred_check_branch
        %392 = sbr.rel (%p390) target = $region40
      $region39: #{ntxent_loss.1} parent=31 // pred_region
        %v393 = vld [vmem:[%s284] sm:$0xff]
        %v394 = vmul.f32 %v393, %v393
        %395 = vadd.xlane.f32.xlu0 %v394
        %v396 = vpop.xlane.xlu0 %395
        %v397 = vmax.f32 %v396, 1e-16
        %v398 = vrsqrt.pop %v397
        %v399 = vmul.f32 %v393, %v398
        %v400 = vmul.f32 %v315, %v399
        %401 = vadd.xlane.f32.xlu0 %v400
        %v402 = vpop.xlane.xlu0 %401
        %v403 = vmul.f32 %v402, 3.3333333
        %v404 = vld [vmem:[#allocation2] sm:$0xff]
        %v405 = vsub.f32 %v404, 1.0
        %v406 = vlog2.pop %v405
        %v407 = vmul.f32 %v406, 0.6931472
        %v408 = vadd.f32 %v407, 3.3333333
        %v409 = vsub.f32 %v408, %v403
        %410 = vst.msk [vmem:[%s307] sm:$0xff] %vm388, %v409
      $region40: #{ntxent_loss.1} parent=31 // pred_fallthru
        _
      %p411 = scmp.lt.s32.totalorder %s18, 1
      %s412 = scalar_select %p411, %s18, 1
      %s413 = smul.addr %s412, 8
      %s414 = scalar_lea.vmem %s3, %s413
      // Predicated region
      $region41: #{ntxent_loss.1} parent=31 // pred_check
        %p415 = pneg %p148
      $region42: #{ntxent_loss.1} parent=31 // pred_check_branch
        %417 = sbr.rel (%p415) target = $region44
      $region43: #{ntxent_loss.1} parent=31 // pred_region
        _
      $region44: #{ntxent_loss.1} parent=31 // pred_fallthru
        _
    $region32: #{ntxent_loss.1} parent=5 // pred_fallthru
      _
    %p418 = scmp.le.s32.totalorder 2, %s9
    // Predicated region
    $region45: #{ntxent_loss.1} parent=5 // pred_check
      %p419 = pneg %p418
    $region46: #{ntxent_loss.1} parent=5 // pred_check_branch
      %421 = sbr.rel (%p419) target = $region48
    $region47: #{ntxent_loss.1} parent=5 // pred_region
      %s422 = ssub.s32 %s9, 2
      // Predicated region
      $region49: #{ntxent_loss.1} parent=47 // pred_check
        %p423 = pneg %p154
      $region50: #{ntxent_loss.1} parent=47 // pred_check_branch
        %425 = sbr.rel (%p423) target = $region52
      $region51: #{ntxent_loss.1} parent=47 // pred_region
        %p426 = scmp.lt.s32.totalorder %s20, 1
        %s427 = scalar_select %p426, %s20, 1
        %s428 = smul.addr %s427, 8
        %s429 = scalar_lea.vmem %s3, %s428
      $region52: #{ntxent_loss.1} parent=47 // pred_fallthru
        _
    $region48: #{ntxent_loss.1} parent=5 // pred_fallthru
      _
  $region6: #{ntxent_loss.1} parent=0 // loop_footer
    %s13 = sadd.s32 1, %s9
  $region7: #{ntxent_loss.1} parent=0 // loop_footer_branch
    %8 = sbr.rel target = $region3
  $region8: #{ntxent_loss.1} parent=0 // loop_exit
    _

</llo_original>
